<compile_context>
chip_gen: v6e
topology: v6e:2x2x1
jax: 0.10.0
libtpu: 0.0.40
codegen_flags: <defaults>
</compile_context>

<pallas_src>
import jax
import jax.numpy as jnp
import numpy as np
from jax.experimental import pallas as pl
from jax.experimental.pallas import tpu as pltpu


def _round_up(a: int, m: int) -> int:
    return ((a + m - 1) // m) * m


def _skew_kernel(x_ref, w1_ref, b1_ref, w2_ref, b2_ref, s_ref, o_ref):
    # MLP: Linear -> Tanh -> Linear  (bf16 MXU matmuls, f32 accumulation).
    xb = x_ref[...].astype(jnp.bfloat16)
    h = jnp.tanh(
        jnp.dot(xb, w1_ref[...], preferred_element_type=jnp.float32) + b1_ref[...]
    )
    p = (
        jnp.dot(h.astype(jnp.bfloat16), w2_ref[...],
                preferred_element_type=jnp.float32)
        + b2_ref[...]
    )
    # Exact +/-1 scatter of the triu params into the packed, lane-dense
    # flattened skew matrix (kept in f32 so the +/- duplication is exact).
    o_ref[...] = jnp.dot(p, s_ref[...], preferred_element_type=jnp.float32)


def make_scatter_matrix(dim: int) -> jnp.ndarray:
    """Constant [n_params, dim*dim] matrix mapping triu params -> skew J."""
    n_params = dim * (dim - 1) // 2
    S = np.zeros((n_params, dim * dim), dtype=np.float32)
    idx = 0
    for i in range(dim):
        for j in range(i + 1, dim):
            S[idx, i * dim + j] = 1.0
            S[idx, j * dim + i] = -1.0
            idx += 1
    return jnp.asarray(S)


def skew_symmetric_matrix(x, w1, b1, w2, b2, dim: int, *, row_tile: int = 512):
    """Forward pass: x [batch, dim] -> J [batch, dim, dim] (skew-symmetric)."""
    batch = x.shape[0]
    hidden = w1.shape[1]
    n_params = dim * (dim - 1) // 2
    jj = dim * dim

    # Lane-dense packing: g batch rows per 128-lane output row.
    g = max(1, 128 // jj)

    rows_needed = pl.cdiv(batch, g)
    tr = min(row_tile, _round_up(rows_needed, 8))   # packed rows per tile (mult of 8)
    rows = _round_up(rows_needed, tr)               # total packed rows (mult of tr)
    bp = rows * g                                   # padded batch

    # Pad batch and pack g rows into the lane axis: [rows, g*dim].
    xp = jnp.pad(x, ((0, bp - batch), (0, 0))).reshape(rows, g * dim)

    # Block-diagonal (packed) weights: built once, stay VMEM-resident.
    eye = jnp.eye(g, dtype=jnp.float32)
    w1p = jnp.kron(eye, w1.astype(jnp.float32)).astype(jnp.bfloat16)   # [g*dim, g*hidden]
    w2p = jnp.kron(eye, w2.astype(jnp.float32)).astype(jnp.bfloat16)   # [g*hidden, g*n_params]
    b1p = jnp.tile(b1.reshape(1, hidden), (1, g)).astype(jnp.float32)  # [1, g*hidden]
    b2p = jnp.tile(b2.reshape(1, n_params), (1, g)).astype(jnp.float32)
    sp = jnp.kron(eye, make_scatter_matrix(dim))                       # [g*n_params, g*jj]

    def resident(shape):
        return pl.BlockSpec(shape, lambda i: (0, 0))

    j_packed = pl.pallas_call(
        _skew_kernel,
        out_shape=jax.ShapeDtypeStruct((rows, g * jj), jnp.float32),
        grid=(rows // tr,),
        in_specs=[
            pl.BlockSpec((tr, g * dim), lambda i: (i, 0)),   # streamed x tiles
            resident((g * dim, g * hidden)),                 # W1 (block-diag, bf16)
            resident((1, g * hidden)),                       # b1
            resident((g * hidden, g * n_params)),            # W2 (block-diag, bf16)
            resident((1, g * n_params)),                     # b2
            resident((g * n_params, g * jj)),                # scatter S (block-diag, f32)
        ],
        out_specs=pl.BlockSpec((tr, g * jj), lambda i: (i, 0)),
        compiler_params=pltpu.CompilerParams(
            dimension_semantics=("parallel",),               # megacore split on v7x
        ),
    )(xp, w1p, b1p, w2p, b2p, sp)

    # Unpack: [rows, g*jj] -> [bp, jj] -> [batch, dim, dim].
    return j_packed.reshape(bp, jj)[:batch].reshape(batch, dim, dim)


if __name__ == "__main__":
    dim = 4
    hidden_dim = 32
    batch = 16
    n_params = dim * (dim - 1) // 2

    key = jax.random.PRNGKey(0)
    kx, k1, k2, k3, k4 = jax.random.split(key, 5)

    # Deterministic parameter init (shapes match nn.Linear(dim, hidden) and
    # nn.Linear(hidden, n_params); stored as [in, out]).
    x = jax.random.normal(kx, (batch, dim), dtype=jnp.float32)
    w1 = jax.random.normal(k1, (dim, hidden_dim), dtype=jnp.float32) * 0.2
    b1 = jax.random.normal(k2, (1, hidden_dim), dtype=jnp.float32) * 0.1
    w2 = jax.random.normal(k3, (hidden_dim, n_params), dtype=jnp.float32) * 0.2
    b2 = jax.random.normal(k4, (1, n_params), dtype=jnp.float32) * 0.1

    J = skew_symmetric_matrix(x, w1, b1, w2, b2, dim)
    J = jax.block_until_ready(J)

    # Pure-JAX f32 reference (mirrors the PyTorch forward exactly).
    p_ref = jnp.tanh(x @ w1 + b1) @ w2 + b2
    p_np = np.asarray(p_ref)
    J_ref = np.zeros((batch, dim, dim), dtype=np.float32)
    idx = 0
    for i in range(dim):
        for j in range(i + 1, dim):
            J_ref[:, i, j] = p_np[:, idx]
            J_ref[:, j, i] = -p_np[:, idx]
            idx += 1

    # bf16 MXU matmuls (f32 accumulation) => loosened tolerance vs f32 ref.
    np.testing.assert_allclose(np.asarray(J), J_ref, rtol=2e-2, atol=2e-2)
    # Skew-symmetry is exact: the +/-1 scatter matmul is done in f32.
    np.testing.assert_allclose(
        np.asarray(J) + np.asarray(J).transpose(0, 2, 1), 0.0, atol=1e-6
    )

    print("KERNEL_OK")
</pallas_src>

<mosaic_0001>
module attributes {stable_mosaic.version = 11 : i64} {
  func.func @_skew_kernel(%arg0: i32, %arg1: memref<8x32xf32, #tpu.memory_space<vmem>>, %arg2: memref<32x256xbf16, #tpu.memory_space<vmem>>, %arg3: memref<1x256xf32, #tpu.memory_space<vmem>>, %arg4: memref<256x48xbf16, #tpu.memory_space<vmem>>, %arg5: memref<1x48xf32, #tpu.memory_space<vmem>>, %arg6: memref<48x128xf32, #tpu.memory_space<vmem>>, %arg7: memref<8x128xf32, #tpu.memory_space<vmem>>) attributes {dimension_semantics = [#tpu.dimension_semantics<parallel>], iteration_bounds = array<i64: 1>, scalar_prefetch = 0 : i64, scratch_operands = 0 : i64, tpu.core_type = #tpu.core_type<tc>, window_params = [{transform_indices = @transform_0, window_bounds = array<i64: 8, 32>}, {pipeline_mode = #tpu.pipeline_mode<synchronous>, transform_indices = @transform_1, window_bounds = array<i64: 32, 256>}, {pipeline_mode = #tpu.pipeline_mode<synchronous>, transform_indices = @transform_2, window_bounds = array<i64: 1, 256>}, {pipeline_mode = #tpu.pipeline_mode<synchronous>, transform_indices = @transform_3, window_bounds = array<i64: 256, 48>}, {pipeline_mode = #tpu.pipeline_mode<synchronous>, transform_indices = @transform_4, window_bounds = array<i64: 1, 48>}, {pipeline_mode = #tpu.pipeline_mode<synchronous>, transform_indices = @transform_5, window_bounds = array<i64: 48, 128>}, {transform_indices = @transform_6, window_bounds = array<i64: 8, 128>}]} {
    %c0 = arith.constant 0 : index
    %c0_0 = arith.constant 0 : index
    %0 = vector.load %arg1[%c0, %c0_0] : memref<8x32xf32, #tpu.memory_space<vmem>>, vector<8x32xf32>
    %1 = arith.truncf %0 : vector<8x32xf32> to vector<8x32xbf16>
    %c0_1 = arith.constant 0 : index
    %c0_2 = arith.constant 0 : index
    %2 = vector.load %arg2[%c0_1, %c0_2] : memref<32x256xbf16, #tpu.memory_space<vmem>>, vector<32x256xbf16>
    %cst = arith.constant dense<0.000000e+00> : vector<8x256xf32>
    %3 = tpu.matmul %1, %2, %cst {dimension_numbers = #tpu.dot_dimension_numbers<[1], [0], [0], [1], [0, 0, 1, 1], [], []>} : vector<8x32xbf16>, vector<32x256xbf16>, vector<8x256xf32> -> vector<8x256xf32>
    %c0_3 = arith.constant 0 : index
    %c0_4 = arith.constant 0 : index
    %4 = vector.load %arg3[%c0_3, %c0_4] : memref<1x256xf32, #tpu.memory_space<vmem>>, vector<1x256xf32>
    %5 = vector.broadcast %4 : vector<1x256xf32> to vector<8x256xf32>
    %6 = arith.addf %3, %5 : vector<8x256xf32>
    %7 = math.tanh %6 : vector<8x256xf32>
    %8 = arith.truncf %7 : vector<8x256xf32> to vector<8x256xbf16>
    %c0_5 = arith.constant 0 : index
    %c0_6 = arith.constant 0 : index
    %9 = vector.load %arg4[%c0_5, %c0_6] : memref<256x48xbf16, #tpu.memory_space<vmem>>, vector<256x48xbf16>
    %cst_7 = arith.constant dense<0.000000e+00> : vector<8x48xf32>
    %10 = tpu.matmul %8, %9, %cst_7 {dimension_numbers = #tpu.dot_dimension_numbers<[1], [0], [0], [1], [0, 0, 1, 1], [], []>} : vector<8x256xbf16>, vector<256x48xbf16>, vector<8x48xf32> -> vector<8x48xf32>
    %c0_8 = arith.constant 0 : index
    %c0_9 = arith.constant 0 : index
    %11 = vector.load %arg5[%c0_8, %c0_9] : memref<1x48xf32, #tpu.memory_space<vmem>>, vector<1x48xf32>
    %12 = vector.broadcast %11 : vector<1x48xf32> to vector<8x48xf32>
    %13 = arith.addf %10, %12 : vector<8x48xf32>
    %c0_10 = arith.constant 0 : index
    %c0_11 = arith.constant 0 : index
    %14 = vector.load %arg6[%c0_10, %c0_11] : memref<48x128xf32, #tpu.memory_space<vmem>>, vector<48x128xf32>
    %cst_12 = arith.constant dense<0.000000e+00> : vector<8x128xf32>
    %15 = tpu.matmul %13, %14, %cst_12 {dimension_numbers = #tpu.dot_dimension_numbers<[1], [0], [0], [1], [0, 0, 1, 1], [], []>} : vector<8x48xf32>, vector<48x128xf32>, vector<8x128xf32> -> vector<8x128xf32>
    %c0_13 = arith.constant 0 : index
    %c0_14 = arith.constant 0 : index
    %16 = vector.load %arg7[%c0_13, %c0_14] : memref<8x128xf32, #tpu.memory_space<vmem>>, vector<8x128xf32>
    tpu.vector_store %arg7[%c0_13, %c0_14], %15 {strides = array<i32>} : memref<8x128xf32, #tpu.memory_space<vmem>>, vector<8x128xf32>,
    return
  }
  func.func @transform_0(%arg0: i32) -> (i32, i32) {
    %c0_i32 = arith.constant 0 : i32
    %c0_i32_0 = arith.constant 0 : i32
    return %arg0, %c0_i32 : i32, i32
  }
  func.func @transform_1(%arg0: i32) -> (i32, i32) {
    %c0_i32 = arith.constant 0 : i32
    %c0_i32_0 = arith.constant 0 : i32
    %c0_i32_1 = arith.constant 0 : i32
    return %c0_i32, %c0_i32_0 : i32, i32
  }
  func.func @transform_2(%arg0: i32) -> (i32, i32) {
    %c0_i32 = arith.constant 0 : i32
    %c0_i32_0 = arith.constant 0 : i32
    %c0_i32_1 = arith.constant 0 : i32
    return %c0_i32, %c0_i32_0 : i32, i32
  }
  func.func @transform_3(%arg0: i32) -> (i32, i32) {
    %c0_i32 = arith.constant 0 : i32
    %c0_i32_0 = arith.constant 0 : i32
    %c0_i32_1 = arith.constant 0 : i32
    return %c0_i32, %c0_i32_0 : i32, i32
  }
  func.func @transform_4(%arg0: i32) -> (i32, i32) {
    %c0_i32 = arith.constant 0 : i32
    %c0_i32_0 = arith.constant 0 : i32
    %c0_i32_1 = arith.constant 0 : i32
    return %c0_i32, %c0_i32_0 : i32, i32
  }
  func.func @transform_5(%arg0: i32) -> (i32, i32) {
    %c0_i32 = arith.constant 0 : i32
    %c0_i32_0 = arith.constant 0 : i32
    %c0_i32_1 = arith.constant 0 : i32
    return %c0_i32, %c0_i32_0 : i32, i32
  }
  func.func @transform_6(%arg0: i32) -> (i32, i32) {
    %c0_i32 = arith.constant 0 : i32
    %c0_i32_0 = arith.constant 0 : i32
    return %arg0, %c0_i32 : i32, i32
  }
}

</mosaic_0001>

<llo_original>
// kernel: tpu_custom_call.1
$region0: #{tpu_custom_call.1}
  #allocation0 [shape = 'u32[]', space=smem, size = 0x4, offset = 0x4, fixed_abs, tag = 'smem constant byte address 0x4 - core index']
  #allocation1 [shape = 'u32[144,128]{1,0:T(1,128)}', space=vmem, size = 0x12000, scoped, tag = 'internal scratch']
  %s0 = inlined_call_operand.vmem [shape: f32[8,32], index: 0, kind: input, shape index: {}]
  %s1 = inlined_call_operand.vmem [shape: bf16[32,256], index: 1, kind: input, shape index: {}]
  %s2 = inlined_call_operand.vmem [shape: f32[1,256], index: 2, kind: input, shape index: {}]
  %s3 = inlined_call_operand.vmem [shape: bf16[256,48], index: 3, kind: input, shape index: {}]
  %s4 = inlined_call_operand.vmem [shape: f32[1,48], index: 4, kind: input, shape index: {}]
  %s5 = inlined_call_operand.vmem [shape: f32[48,128], index: 5, kind: input, shape index: {}]
  %s6 = inlined_call_operand.hbm [shape: f32[8,128], index: 6, kind: output, shape index: {}]
  %s7 = sld [smem:[#allocation0]]
  $region34: #{tpu_custom_call.1} parent=0
    _
  %s9 = ssub.s32 1, %s7
  %s10 = scalar_select 0, %s9, %s7
  $region1: #{tpu_custom_call.1} parent=0
    #allocation2 [shape = 'u8[4096]{0}', space=vmem, size = 0x1000, scoped, tag = 'output window, operand 0, single buffered']
    #allocation3 [shape = 's32[1]{0}', space=sflag, size = 0x4, scoped, tag = 'scoped memory for tpu_custom_call.1']
    %11 = vsyncpa [#allocation3], 0
    // Predicated region
    $region2: #{tpu_custom_call.1} parent=1 // pred_check
      _
    $region3: #{tpu_custom_call.1} parent=1 // pred_check_branch
      %13 = sbr.rel (0) target = $region5
    $region4: #{tpu_custom_call.1} parent=1 // pred_region
      _
    $region5: #{tpu_custom_call.1} parent=1 // pred_fallthru
      _
    // Predicated region
    $region6: #{tpu_custom_call.1} parent=1 // pred_check
      _
    $region7: #{tpu_custom_call.1} parent=1 // pred_check_branch
      %15 = sbr.rel (0) target = $region9
    $region8: #{tpu_custom_call.1} parent=1 // pred_region
      _
    $region9: #{tpu_custom_call.1} parent=1 // pred_fallthru
      _
    // Predicated region
    $region10: #{tpu_custom_call.1} parent=1 // pred_check
      _
    $region11: #{tpu_custom_call.1} parent=1 // pred_check_branch
      %17 = sbr.rel (0) target = $region13
    $region12: #{tpu_custom_call.1} parent=1 // pred_region
      _
    $region13: #{tpu_custom_call.1} parent=1 // pred_fallthru
      _
    // Predicated region
    $region14: #{tpu_custom_call.1} parent=1 // pred_check
      _
    $region15: #{tpu_custom_call.1} parent=1 // pred_check_branch
      %19 = sbr.rel (0) target = $region17
    $region16: #{tpu_custom_call.1} parent=1 // pred_region
      _
    $region17: #{tpu_custom_call.1} parent=1 // pred_fallthru
      _
    // Predicated region
    $region18: #{tpu_custom_call.1} parent=1 // pred_check
      _
    $region19: #{tpu_custom_call.1} parent=1 // pred_check_branch
      %21 = sbr.rel (0) target = $region21
    $region20: #{tpu_custom_call.1} parent=1 // pred_region
      _
    $region21: #{tpu_custom_call.1} parent=1 // pred_fallthru
      _
    // Predicated region
    $region22: #{tpu_custom_call.1} parent=1 // pred_check
      _
    $region23: #{tpu_custom_call.1} parent=1 // pred_check_branch
      %23 = sbr.rel (0) target = $region25
    $region24: #{tpu_custom_call.1} parent=1 // pred_region
      _
    $region25: #{tpu_custom_call.1} parent=1 // pred_fallthru
      _
    %v25 = vld [vmem:[%s0] sm:$0xff]
    %v26 = vpack.c.bf16 %v25, %v25
    %v27 = vld [vmem:[%s1] sm:$0xff]
    %v28 = vld [vmem:[%s1 + $0x8] sm:$0xff]
    %v29 = vld [vmem:[%s1 + $0x10] sm:$0xff]
    %v30 = vld [vmem:[%s1 + $0x18] sm:$0xff]
    %v31 = vld [vmem:[%s2] sm:$0x3]
    %v33 = vlaneseq
    %v34 = vshrl.u32 %v33, 7
    %v35 = vsub.s32 0, %v34
    %v36 = vrot.slane %v31, %v35
    %v37 = vlaneseq
    %v38 = vshrl.u32 %v37, 7
    %v39 = vsub.s32 1, %v38
    %v40 = vrot.slane %v31, %v39
    %v47 = vunpack.c.l.b16 %v27
    %v48 = vunpack.c.h.b16 %v27
    %v49 = vunpack.c.l.b16 %v28
    %v50 = vunpack.c.h.b16 %v28
    %v51 = vunpack.c.l.b16 %v29
    %v52 = vunpack.c.h.b16 %v29
    %v53 = vunpack.c.l.b16 %v30
    %v54 = vunpack.c.h.b16 %v30
    %v55 = vpack.c.b16 %v49, %v47
    %v56 = vpack.c.b16 %v50, %v48
    %v57 = vpack.c.b16 %v53, %v51
    %v58 = vpack.c.b16 %v54, %v52
    %vm63 = vcmask 261120
    %v65 = vsel %vm63, %v26, 0
    %67 = vmatprep.subr.bf16.mxu0 0
    %68 = vmatpush1.bf16.msra.mxu0 0
    %69 = vmatprep.subr.bf16.mxu0 0
    %70 = vmatpush1.bf16.msra.mxu0 0
    %71 = vmatprep.subr.bf16.mxu0 0
    %72 = vmatpush1.bf16.msra.mxu0 0
    %73 = vmatprep.subr.bf16.mxu0 0
    %74 = vmatpush1.bf16.msra.mxu0 0
    %75 = vmatprep.subr.bf16.mxu0 0
    %76 = vmatpush1.bf16.msra.mxu0 0
    %77 = vmatprep.subr.bf16.mxu0 0
    %78 = vmatpush1.bf16.msra.mxu0 0
    %79 = vmatprep.subr.bf16.mxu0 %v58
    %80 = vmatpush1.bf16.msra.mxu0 %v57
    %81 = vmatprep.subr.bf16.mxu0 %v56
    %82 = vmatpush1.bf16.msra.mxu0 %v55
    %83 = vmatprep.subr.bf16.mxu0 0
    %84 = vmatpush2.bf16.msra.mxu0 0
    %85 = vmatprep.subr.bf16.mxu0 0
    %86 = vmatpush2.bf16.msra.mxu0 0
    %87 = vmatprep.subr.bf16.mxu0 0
    %88 = vmatpush2.bf16.msra.mxu0 0
    %89 = vmatprep.subr.bf16.mxu0 0
    %90 = vmatpush2.bf16.msra.mxu0 0
    %91 = vmatprep.subr.bf16.mxu0 0
    %92 = vmatpush2.bf16.msra.mxu0 0
    %93 = vmatprep.subr.bf16.mxu0 0
    %94 = vmatpush2.bf16.msra.mxu0 0
    %95 = vmatprep.subr.bf16.mxu0 0
    %96 = vmatpush2.bf16.msra.mxu0 0
    %97 = vmatprep.subr.bf16.mxu0 0
    %98 = vmatpush2.bf16.msra.mxu0 0
    %99 = vmatprep.mubr.bf16.mxu0 0
    %100 = vmatmul.mubr.bf16.gmra.mxu0 %v65
    %v101 = vpop.f32.mrf.mxu0
    %v102 = vadd.f32 %v36, %v101
    %v103 = vpop.f32.mrf.mxu0
    %v104 = vadd.f32 %v40, %v103
    %v105 = vpop.f32.mrf.mxu0
    %v106 = vpop.f32.mrf.mxu0
    %107 = vdwg.mxu0
    %v108 = vtanh.pop %v102
    %v109 = vtanh.pop %v104
    %v110 = vpack.c.bf16 %v108, %v108
    %v111 = vpack.c.bf16 %v109, %v109
    %v112 = vld [vmem:[%s3] sm:$0xf]
    %v113 = vld [vmem:[%s3 + $0x4] sm:$0xf]
    %v114 = vld [vmem:[%s3 + $0x8] sm:$0xf]
    %v115 = vld [vmem:[%s3 + $0xc] sm:$0xf]
    %v116 = vld [vmem:[%s3 + $0x10] sm:$0xf]
    %v117 = vld [vmem:[%s3 + $0x14] sm:$0xf]
    %v118 = vld [vmem:[%s3 + $0x18] sm:$0xf]
    %v119 = vld [vmem:[%s3 + $0x1c] sm:$0xf]
    %v120 = vld [vmem:[%s3 + $0x20] sm:$0xf]
    %v121 = vld [vmem:[%s3 + $0x24] sm:$0xf]
    %v122 = vld [vmem:[%s3 + $0x28] sm:$0xf]
    %v123 = vld [vmem:[%s3 + $0x2c] sm:$0xf]
    %v124 = vld [vmem:[%s3 + $0x30] sm:$0xf]
    %v125 = vld [vmem:[%s3 + $0x34] sm:$0xf]
    %v126 = vld [vmem:[%s3 + $0x38] sm:$0xf]
    %v127 = vld [vmem:[%s3 + $0x3c] sm:$0xf]
    %v128 = vld [vmem:[%s3 + $0x40] sm:$0xf]
    %v129 = vld [vmem:[%s3 + $0x44] sm:$0xf]
    %v130 = vld [vmem:[%s3 + $0x48] sm:$0xf]
    %v131 = vld [vmem:[%s3 + $0x4c] sm:$0xf]
    %v132 = vld [vmem:[%s3 + $0x50] sm:$0xf]
    %v133 = vld [vmem:[%s3 + $0x54] sm:$0xf]
    %v134 = vld [vmem:[%s3 + $0x58] sm:$0xf]
    %v135 = vld [vmem:[%s3 + $0x5c] sm:$0xf]
    %v136 = vld [vmem:[%s3 + $0x60] sm:$0xf]
    %v137 = vld [vmem:[%s3 + $0x64] sm:$0xf]
    %v138 = vld [vmem:[%s3 + $0x68] sm:$0xf]
    %v139 = vld [vmem:[%s3 + $0x6c] sm:$0xf]
    %v140 = vld [vmem:[%s3 + $0x70] sm:$0xf]
    %v141 = vld [vmem:[%s3 + $0x74] sm:$0xf]
    %v142 = vld [vmem:[%s3 + $0x78] sm:$0xf]
    %v143 = vld [vmem:[%s3 + $0x7c] sm:$0xf]
    %v144 = vld [vmem:[%s4] sm:$0x1]
    %v146 = vlaneseq
    %v147 = vshrl.u32 %v146, 7
    %v148 = vsub.s32 0, %v147
    %v149 = vrot.slane %v144, %v148
    %v183 = vunpack.c.l.b16 %v112
    %v184 = vunpack.c.l.b16 %v113
    %v185 = vunpack.c.l.b16 %v114
    %v186 = vunpack.c.l.b16 %v115
    %v187 = vunpack.c.l.b16 %v116
    %v188 = vunpack.c.l.b16 %v117
    %v189 = vunpack.c.l.b16 %v118
    %v190 = vunpack.c.l.b16 %v119
    %v191 = vunpack.c.l.b16 %v120
    %v192 = vunpack.c.l.b16 %v121
    %v193 = vunpack.c.l.b16 %v122
    %v194 = vunpack.c.l.b16 %v123
    %v195 = vunpack.c.l.b16 %v124
    %v196 = vunpack.c.l.b16 %v125
    %v197 = vunpack.c.l.b16 %v126
    %v198 = vunpack.c.l.b16 %v127
    %v199 = vunpack.c.l.b16 %v128
    %v200 = vunpack.c.l.b16 %v129
    %v201 = vunpack.c.l.b16 %v130
    %v202 = vunpack.c.l.b16 %v131
    %v203 = vunpack.c.l.b16 %v132
    %v204 = vunpack.c.l.b16 %v133
    %v205 = vunpack.c.l.b16 %v134
    %v206 = vunpack.c.l.b16 %v135
    %v207 = vunpack.c.l.b16 %v136
    %v208 = vunpack.c.l.b16 %v137
    %v209 = vunpack.c.l.b16 %v138
    %v210 = vunpack.c.l.b16 %v139
    %v211 = vunpack.c.l.b16 %v140
    %v212 = vunpack.c.l.b16 %v141
    %v213 = vunpack.c.l.b16 %v142
    %v214 = vunpack.c.l.b16 %v143
    %v215 = vpack.c.b16 %v184, %v183
    %v216 = vpack.c.b16 %v186, %v185
    %v217 = vpack.c.b16 %v188, %v187
    %v218 = vpack.c.b16 %v190, %v189
    %v219 = vpack.c.b16 %v192, %v191
    %v220 = vpack.c.b16 %v194, %v193
    %v221 = vpack.c.b16 %v196, %v195
    %v222 = vpack.c.b16 %v198, %v197
    %v223 = vpack.c.b16 %v200, %v199
    %v224 = vpack.c.b16 %v202, %v201
    %v225 = vpack.c.b16 %v204, %v203
    %v226 = vpack.c.b16 %v206, %v205
    %v227 = vpack.c.b16 %v208, %v207
    %v228 = vpack.c.b16 %v210, %v209
    %v229 = vpack.c.b16 %v212, %v211
    %v230 = vpack.c.b16 %v214, %v213
    %247 = vmatprep.subr.bf16.mxu0 0
    %248 = vmatpush1.bf16.msra.mxu0 %v222
    %249 = vmatprep.subr.bf16.mxu0 0
    %250 = vmatpush1.bf16.msra.mxu0 %v221
    %251 = vmatprep.subr.bf16.mxu0 0
    %252 = vmatpush1.bf16.msra.mxu0 %v220
    %253 = vmatprep.subr.bf16.mxu0 0
    %254 = vmatpush1.bf16.msra.mxu0 %v219
    %255 = vmatprep.subr.bf16.mxu0 0
    %256 = vmatpush1.bf16.msra.mxu0 %v218
    %257 = vmatprep.subr.bf16.mxu0 0
    %258 = vmatpush1.bf16.msra.mxu0 %v217
    %259 = vmatprep.subr.bf16.mxu0 0
    %260 = vmatpush1.bf16.msra.mxu0 %v216
    %261 = vmatprep.subr.bf16.mxu0 0
    %262 = vmatpush1.bf16.msra.mxu0 %v215
    %263 = vmatprep.subr.bf16.mxu0 0
    %264 = vmatpush2.bf16.msra.mxu0 %v230
    %265 = vmatprep.subr.bf16.mxu0 0
    %266 = vmatpush2.bf16.msra.mxu0 %v229
    %267 = vmatprep.subr.bf16.mxu0 0
    %268 = vmatpush2.bf16.msra.mxu0 %v228
    %269 = vmatprep.subr.bf16.mxu0 0
    %270 = vmatpush2.bf16.msra.mxu0 %v227
    %271 = vmatprep.subr.bf16.mxu0 0
    %272 = vmatpush2.bf16.msra.mxu0 %v226
    %273 = vmatprep.subr.bf16.mxu0 0
    %274 = vmatpush2.bf16.msra.mxu0 %v225
    %275 = vmatprep.subr.bf16.mxu0 0
    %276 = vmatpush2.bf16.msra.mxu0 %v224
    %277 = vmatprep.subr.bf16.mxu0 0
    %278 = vmatpush2.bf16.msra.mxu0 %v223
    %279 = vmatprep.mubr.bf16.mxu0 %v111
    %280 = vmatmul.mubr.bf16.gmra.mxu0 %v110
    %v281 = vpop.f32.mrf.mxu0
    %v282 = vadd.f32 %v149, %v281
    %v283 = vpop.f32.mrf.mxu0
    %v284 = vpop.f32.mrf.mxu0
    %v285 = vpop.f32.mrf.mxu0
    %286 = vdwg.mxu0
    %v287 = vld [vmem:[%s5] sm:$0xff]
    %v288 = vld [vmem:[%s5 + $0x8] sm:$0xff]
    %v289 = vld [vmem:[%s5 + $0x10] sm:$0xff]
    %v290 = vld [vmem:[%s5 + $0x18] sm:$0xff]
    %v291 = vld [vmem:[%s5 + $0x20] sm:$0xff]
    %v292 = vld [vmem:[%s5 + $0x28] sm:$0xff]
    %vm293 = vcmask 392192
    %v295 = vsel %vm293, %v282, 0
    %297 = vmatprep.subr.mxu0 0.0
    %298 = vmatpush1.msra.mxu0 0.0
    %299 = vmatprep.subr.mxu0 0.0
    %300 = vmatpush1.msra.mxu0 0.0
    %301 = vmatprep.subr.mxu0 0.0
    %302 = vmatpush1.msra.mxu0 0.0
    %303 = vmatprep.subr.mxu0 0.0
    %304 = vmatpush1.msra.mxu0 0.0
    %305 = vmatprep.subr.mxu0 0.0
    %306 = vmatpush1.msra.mxu0 0.0
    %307 = vmatprep.subr.mxu0 0.0
    %308 = vmatpush1.msra.mxu0 0.0
    %309 = vmatprep.subr.mxu0 0.0
    %310 = vmatpush1.msra.mxu0 0.0
    %311 = vmatprep.subr.mxu0 0.0
    %312 = vmatpush1.msra.mxu0 0.0
    %313 = vmatprep.subr.mxu0 0.0
    %314 = vmatpush1.msra.mxu0 0.0
    %315 = vmatprep.subr.mxu0 0.0
    %316 = vmatpush1.msra.mxu0 0.0
    %317 = vmatprep.subr.mxu0 0.0
    %318 = vmatpush1.msra.mxu0 %v292
    %319 = vmatprep.subr.mxu0 0.0
    %320 = vmatpush1.msra.mxu0 %v291
    %321 = vmatprep.subr.mxu0 0.0
    %322 = vmatpush1.msra.mxu0 %v290
    %323 = vmatprep.subr.mxu0 0.0
    %324 = vmatpush1.msra.mxu0 %v289
    %325 = vmatprep.subr.mxu0 0.0
    %326 = vmatpush1.msra.mxu0 %v288
    %327 = vmatprep.subr.mxu0 0.0
    %328 = vmatpush1.msra.mxu0 %v287
    %329 = vmatprep.subr.mxu0 0.0
    %330 = vmatpush2.msra.mxu0 0.0
    %331 = vmatprep.subr.mxu0 0.0
    %332 = vmatpush2.msra.mxu0 0.0
    %333 = vmatprep.subr.mxu0 0.0
    %334 = vmatpush2.msra.mxu0 0.0
    %335 = vmatprep.subr.mxu0 0.0
    %336 = vmatpush2.msra.mxu0 0.0
    %337 = vmatprep.subr.mxu0 0.0
    %338 = vmatpush2.msra.mxu0 0.0
    %339 = vmatprep.subr.mxu0 0.0
    %340 = vmatpush2.msra.mxu0 0.0
    %341 = vmatprep.subr.mxu0 0.0
    %342 = vmatpush2.msra.mxu0 0.0
    %343 = vmatprep.subr.mxu0 0.0
    %344 = vmatpush2.msra.mxu0 0.0
    %345 = vmatprep.subr.mxu0 0.0
    %346 = vmatpush2.msra.mxu0 0.0
    %347 = vmatprep.subr.mxu0 0.0
    %348 = vmatpush2.msra.mxu0 0.0
    %349 = vmatprep.subr.mxu0 0.0
    %350 = vmatpush2.msra.mxu0 0.0
    %351 = vmatprep.subr.mxu0 0.0
    %352 = vmatpush2.msra.mxu0 0.0
    %353 = vmatprep.subr.mxu0 0.0
    %354 = vmatpush2.msra.mxu0 0.0
    %355 = vmatprep.subr.mxu0 0.0
    %356 = vmatpush2.msra.mxu0 0.0
    %357 = vmatprep.subr.mxu0 0.0
    %358 = vmatpush2.msra.mxu0 0.0
    %359 = vmatprep.subr.mxu0 0.0
    %360 = vmatpush2.msra.mxu0 0.0
    %361 = vmatprep.mubr.f32.mxu0 0.0
    %362 = vmatmul.mubr.f32.gmra.mxu0 %v295
    %v363 = vpop.f32.mrf.mxu0
    %v364 = vadd.f32 0.0, %v363
    %v365 = vpop.f32.mrf.mxu0
    %366 = vdwg.mxu0
    %367 = vst [vmem:[#allocation2] sm:$0xff] %v364
    // Predicated region
    $region26: #{tpu_custom_call.1} parent=1 // pred_check
      _
    $region27: #{tpu_custom_call.1} parent=1 // pred_check_branch
      %369 = sbr.rel (0) target = $region29
    $region28: #{tpu_custom_call.1} parent=1 // pred_region
      %s371 = ssub.s32 128, 128
      %372 = vsyncadd [#allocation3], %s371
      %s374 = sshll.u32 [#allocation2], 4
      %s375 = int_to_ptr.vmem [resolvable:$true] %s374
      %377 = dma.vmem_to_hbm [thread:$0]  %s375, 128, %s6, [#allocation3]
    $region29: #{tpu_custom_call.1} parent=1 // pred_fallthru
      _
    // Predicated region
    $region30: #{tpu_custom_call.1} parent=1 // pred_check
      _
    $region31: #{tpu_custom_call.1} parent=1 // pred_check_branch
      %379 = sbr.rel (0) target = $region33
    $region32: #{tpu_custom_call.1} parent=1 // pred_region
      %380 = dma.done [#allocation3], 128
    $region33: #{tpu_custom_call.1} parent=1 // pred_fallthru
      _
    %381 = vsyncpa [#allocation3], 1

</llo_original>
